<compile_context>
chip_gen: v7x
topology: tpu7x:2x2x1
jax: 0.10.0
libtpu: 0.0.40
codegen_flags: <defaults>
</compile_context>

<pallas_src>
import jax
import jax.numpy as jnp
from jax import lax
from jax.experimental import pallas as pl
from jax.experimental.pallas import tpu as pltpu

LANE = 128


def txtnet_kernel(x_ref, w1t_ref, b1_ref, w2t_ref, b2_ref, o_ref):
    x = x_ref[...]                                  # (TM, F), f32 (or bf16) stream
    xf = x.astype(jnp.float32)

    # F.normalize(x, dim=1): x / max(||x||, 1e-12)  ==  x * rsqrt(max(ss, 1e-24)).
    # Row scale kept in f32 and applied AFTER the matmul so it never sees bf16.
    ss = jnp.sum(xf * xf, axis=-1, keepdims=True)
    scale = lax.rsqrt(jnp.maximum(ss, 1e-24))       # (TM, 1) f32

    # fc1 + ReLU.  bf16 operands on the MXU, f32 accumulation.
    xb = x.astype(jnp.bfloat16)
    h = jnp.dot(xb, w1t_ref[...], preferred_element_type=jnp.float32)   # (TM, F) f32
    h = jnp.maximum(h * scale + b1_ref[...], 0.0)

    # Dropout(0.3) is identity in eval/inference mode.
    # TODO(synk): training-mode dropout (random mask + 1/(1-p) scaling) not emitted.

    # tohash + tanh.  w2t is zero-padded to (F, 128) so the output store is lane-dense.
    hid = jnp.dot(h.astype(jnp.bfloat16), w2t_ref[...],
                  preferred_element_type=jnp.float32)                   # (TM, c_pad) f32
    o_ref[...] = jnp.tanh(hid + b2_ref[...]).astype(o_ref.dtype)


def txtnet_forward(x, w1, b1, w2, b2, *, block_m=2048):
    """x: (B, F) float32 (or bfloat16). w1: (F, F), b1: (F,), w2: (C, F), b2: (C,)
    in PyTorch (out, in) layout. Returns (B, C) float32."""
    B, F = x.shape
    C = w2.shape[0]
    c_pad = ((C + LANE - 1) // LANE) * LANE

    # One-time weight prep (amortized over the whole grid): transpose to the
    # MXU-native (in, out) layout, cast to bf16, zero-pad code dim to 128 lanes.
    w1t = w1.T.astype(jnp.bfloat16)                                       # (F, F)
    w2t = jnp.zeros((F, c_pad), jnp.bfloat16).at[:, :C].set(
        w2.T.astype(jnp.bfloat16))                                        # (F, c_pad)
    b1r = b1.reshape(1, F).astype(jnp.float32)
    b2p = jnp.zeros((1, c_pad), jnp.float32).at[0, :C].set(
        b2.astype(jnp.float32))

    # Batch tile: large to amortize ~0.35us/step pipeline overhead, but at
    # least 2 tiles whenever B > 8 so the "parallel" axis can shard across
    # v7x's two TensorCores.  Sublane-multiple; ragged last tile handled by
    # Pallas masking (no wrapper-side jnp.pad / extra HBM pass over x).
    half = -(-B // 2)                               # ceil(B / 2)
    tm = min(block_m, max(8, ((half + 7) // 8) * 8))
    grid_m = pl.cdiv(B, tm)

    x_bytes = x.dtype.itemsize
    flops = 2 * B * F * F + 2 * B * F * c_pad
    transcendentals = B * c_pad + B                 # tanh + rsqrt
    bytes_accessed = (B * F * x_bytes               # x stream
                      + 2 * (F * F + F * c_pad)     # bf16 weights
                      + 4 * (F + c_pad)             # f32 biases
                      + 4 * B * c_pad)              # f32 output

    out = pl.pallas_call(
        txtnet_kernel,
        out_shape=jax.ShapeDtypeStruct((B, c_pad), jnp.float32),
        grid=(grid_m,),
        in_specs=[
            pl.BlockSpec((tm, F), lambda i: (i, 0)),        # x tile (streamed)
            pl.BlockSpec((F, F), lambda i: (0, 0)),         # w1^T bf16 (resident)
            pl.BlockSpec((1, F), lambda i: (0, 0)),         # b1 (resident)
            pl.BlockSpec((F, c_pad), lambda i: (0, 0)),     # w2^T padded bf16 (resident)
            pl.BlockSpec((1, c_pad), lambda i: (0, 0)),     # b2 padded (resident)
        ],
        out_specs=pl.BlockSpec((tm, c_pad), lambda i: (i, 0)),
        compiler_params=pltpu.CompilerParams(
            dimension_semantics=("parallel",),
            # tm=2048: ~2*tm*F*4 (x f32) + 2*tm*128*4 (out) + ~1.3 MiB weights
            # ~= 12 MiB, comfortably under 32 MiB on every generation.
            vmem_limit_bytes=32 * 1024 * 1024,
        ),
        cost_estimate=pl.CostEstimate(
            flops=flops,
            transcendentals=transcendentals,
            bytes_accessed=bytes_accessed,
        ),
    )(x, w1t, b1r, w2t, b2p)

    return out[:, :C]


if __name__ == "__main__":
    # Small shapes consistent with the module defaults (txt_feat_len=512, code_len=32).
    B, FEAT, CODE = 8, 512, 32

    key = jax.random.PRNGKey(0)
    kx, k1, kb1, k2, kb2 = jax.random.split(key, 5)

    x = jax.random.normal(kx, (B, FEAT), dtype=jnp.float32)

    # fc1: PyTorch default init ~ U(-1/sqrt(in), 1/sqrt(in))
    bound1 = 1.0 / jnp.sqrt(FEAT).astype(jnp.float32)
    w1 = jax.random.uniform(k1, (FEAT, FEAT), minval=-bound1, maxval=bound1,
                            dtype=jnp.float32)
    b1 = jax.random.uniform(kb1, (FEAT,), minval=-bound1, maxval=bound1,
                            dtype=jnp.float32)

    # tohash: weight ~ N(0, 1) per torch.nn.init.normal_(std=1); bias default uniform
    w2 = jax.random.normal(k2, (CODE, FEAT), dtype=jnp.float32)
    b2 = jax.random.uniform(kb2, (CODE,), minval=-bound1, maxval=bound1,
                            dtype=jnp.float32)

    out = txtnet_forward(x, w1, b1, w2, b2)
    jax.block_until_ready(out)

    # Pure-JAX f32 reference (high-precision matmuls).  Kernel feeds the MXU
    # bf16 operands with f32 accumulation, so tolerance is loosened vs. pure f32.
    xn = x / jnp.maximum(jnp.sqrt(jnp.sum(x * x, axis=1, keepdims=True)), 1e-12)
    feat = jnp.maximum(jnp.dot(xn, w1.T, precision=lax.Precision.HIGHEST) + b1, 0.0)
    ref = jnp.tanh(jnp.dot(feat, w2.T, precision=lax.Precision.HIGHEST) + b2)

    assert out.shape == (B, CODE)
    assert jnp.allclose(out, ref, atol=2.5e-2, rtol=2.5e-2), \
        float(jnp.max(jnp.abs(out - ref)))

    print("KERNEL_OK")
</pallas_src>

<mosaic_0001>
module attributes {stable_mosaic.version = 11 : i64} {
  func.func @txtnet_kernel(%arg0: i32, %arg1: memref<8x512xf32, #tpu.memory_space<vmem>>, %arg2: memref<512x512xbf16, #tpu.memory_space<vmem>>, %arg3: memref<1x512xf32, #tpu.memory_space<vmem>>, %arg4: memref<512x128xbf16, #tpu.memory_space<vmem>>, %arg5: memref<1x128xf32, #tpu.memory_space<vmem>>, %arg6: memref<8x128xf32, #tpu.memory_space<vmem>>) attributes {dimension_semantics = [#tpu.dimension_semantics<parallel>], iteration_bounds = array<i64: 1>, scalar_prefetch = 0 : i64, scratch_operands = 0 : i64, tpu.core_type = #tpu.core_type<tc>, window_params = [{transform_indices = @transform_0, window_bounds = array<i64: 8, 512>}, {pipeline_mode = #tpu.pipeline_mode<synchronous>, transform_indices = @transform_1, window_bounds = array<i64: 512, 512>}, {pipeline_mode = #tpu.pipeline_mode<synchronous>, transform_indices = @transform_2, window_bounds = array<i64: 1, 512>}, {pipeline_mode = #tpu.pipeline_mode<synchronous>, transform_indices = @transform_3, window_bounds = array<i64: 512, 128>}, {pipeline_mode = #tpu.pipeline_mode<synchronous>, transform_indices = @transform_4, window_bounds = array<i64: 1, 128>}, {transform_indices = @transform_5, window_bounds = array<i64: 8, 128>}]} {
    %c0 = arith.constant 0 : index
    %c0_0 = arith.constant 0 : index
    %0 = vector.load %arg1[%c0, %c0_0] : memref<8x512xf32, #tpu.memory_space<vmem>>, vector<8x512xf32>
    %1 = arith.mulf %0, %0 : vector<8x512xf32>
    %cst = arith.constant dense<0.000000e+00> : vector<8xf32>
    %2 = vector.multi_reduction <add>, %1, %cst [1] : vector<8x512xf32> to vector<8xf32>
    %3 = vector.shape_cast %2 : vector<8xf32> to vector<8x1xf32>
    %cst_1 = arith.constant 1.000000e-24 : f32
    %4 = vector.broadcast %cst_1 : f32 to vector<8x1xf32>
    %5 = arith.maximumf %3, %4 : vector<8x1xf32>
    %6 = math.rsqrt %5 : vector<8x1xf32>
    %7 = arith.truncf %0 : vector<8x512xf32> to vector<8x512xbf16>
    %c0_2 = arith.constant 0 : index
    %c0_3 = arith.constant 0 : index
    %8 = vector.load %arg2[%c0_2, %c0_3] : memref<512x512xbf16, #tpu.memory_space<vmem>>, vector<512x512xbf16>
    %cst_4 = arith.constant dense<0.000000e+00> : vector<8x512xf32>
    %9 = tpu.matmul %7, %8, %cst_4 {dimension_numbers = #tpu.dot_dimension_numbers<[1], [0], [0], [1], [0, 0, 1, 1], [], []>} : vector<8x512xbf16>, vector<512x512xbf16>, vector<8x512xf32> -> vector<8x512xf32>
    %10 = vector.broadcast %6 : vector<8x1xf32> to vector<8x512xf32>
    %11 = arith.mulf %9, %10 : vector<8x512xf32>
    %c0_5 = arith.constant 0 : index
    %c0_6 = arith.constant 0 : index
    %12 = vector.load %arg3[%c0_5, %c0_6] : memref<1x512xf32, #tpu.memory_space<vmem>>, vector<1x512xf32>
    %13 = vector.broadcast %12 : vector<1x512xf32> to vector<8x512xf32>
    %14 = arith.addf %11, %13 : vector<8x512xf32>
    %cst_7 = arith.constant 0.000000e+00 : f32
    %15 = vector.broadcast %cst_7 : f32 to vector<8x512xf32>
    %16 = arith.maximumf %14, %15 : vector<8x512xf32>
    %17 = arith.truncf %16 : vector<8x512xf32> to vector<8x512xbf16>
    %c0_8 = arith.constant 0 : index
    %c0_9 = arith.constant 0 : index
    %18 = vector.load %arg4[%c0_8, %c0_9] : memref<512x128xbf16, #tpu.memory_space<vmem>>, vector<512x128xbf16>
    %cst_10 = arith.constant dense<0.000000e+00> : vector<8x128xf32>
    %19 = tpu.matmul %17, %18, %cst_10 {dimension_numbers = #tpu.dot_dimension_numbers<[1], [0], [0], [1], [0, 0, 1, 1], [], []>} : vector<8x512xbf16>, vector<512x128xbf16>, vector<8x128xf32> -> vector<8x128xf32>
    %c0_11 = arith.constant 0 : index
    %c0_12 = arith.constant 0 : index
    %20 = vector.load %arg5[%c0_11, %c0_12] : memref<1x128xf32, #tpu.memory_space<vmem>>, vector<1x128xf32>
    %21 = vector.broadcast %20 : vector<1x128xf32> to vector<8x128xf32>
    %22 = arith.addf %19, %21 : vector<8x128xf32>
    %23 = math.tanh %22 : vector<8x128xf32>
    %c0_13 = arith.constant 0 : index
    %c0_14 = arith.constant 0 : index
    %24 = vector.load %arg6[%c0_13, %c0_14] : memref<8x128xf32, #tpu.memory_space<vmem>>, vector<8x128xf32>
    tpu.vector_store %arg6[%c0_13, %c0_14], %23 {strides = array<i32>} : memref<8x128xf32, #tpu.memory_space<vmem>>, vector<8x128xf32>,
    return
  }
  func.func @transform_0(%arg0: i32) -> (i32, i32) {
    %c0_i32 = arith.constant 0 : i32
    %c0_i32_0 = arith.constant 0 : i32
    return %arg0, %c0_i32 : i32, i32
  }
  func.func @transform_1(%arg0: i32) -> (i32, i32) {
    %c0_i32 = arith.constant 0 : i32
    %c0_i32_0 = arith.constant 0 : i32
    %c0_i32_1 = arith.constant 0 : i32
    return %c0_i32, %c0_i32_0 : i32, i32
  }
  func.func @transform_2(%arg0: i32) -> (i32, i32) {
    %c0_i32 = arith.constant 0 : i32
    %c0_i32_0 = arith.constant 0 : i32
    %c0_i32_1 = arith.constant 0 : i32
    return %c0_i32, %c0_i32_0 : i32, i32
  }
  func.func @transform_3(%arg0: i32) -> (i32, i32) {
    %c0_i32 = arith.constant 0 : i32
    %c0_i32_0 = arith.constant 0 : i32
    %c0_i32_1 = arith.constant 0 : i32
    return %c0_i32, %c0_i32_0 : i32, i32
  }
  func.func @transform_4(%arg0: i32) -> (i32, i32) {
    %c0_i32 = arith.constant 0 : i32
    %c0_i32_0 = arith.constant 0 : i32
    %c0_i32_1 = arith.constant 0 : i32
    return %c0_i32, %c0_i32_0 : i32, i32
  }
  func.func @transform_5(%arg0: i32) -> (i32, i32) {
    %c0_i32 = arith.constant 0 : i32
    %c0_i32_0 = arith.constant 0 : i32
    return %arg0, %c0_i32 : i32, i32
  }
}

</mosaic_0001>

<llo_original>
// kernel: tpu_custom_call.1
$region0: #{tpu_custom_call.1}
  #allocation0 [shape = 'u32[]', space=smem, size = 0x4, offset = 0x4, fixed_abs, tag = 'smem constant byte address 0x4 - core index']
  #allocation1 [shape = 'u32[144,128]{1,0:T(1,128)}', space=vmem, size = 0x12000, scoped, tag = 'internal scratch']
  %s0 = inlined_call_operand.hbm [shape: f32[8,512], index: 0, kind: input, shape index: {}]
  %s1 = inlined_call_operand.hbm [shape: bf16[512,512], index: 1, kind: input, shape index: {}]
  %s2 = inlined_call_operand.vmem [shape: f32[1,512], index: 2, kind: input, shape index: {}]
  %s3 = inlined_call_operand.hbm [shape: bf16[512,128], index: 3, kind: input, shape index: {}]
  %s4 = inlined_call_operand.vmem [shape: f32[1,128], index: 4, kind: input, shape index: {}]
  %s5 = inlined_call_operand.hbm [shape: f32[8,128], index: 5, kind: output, shape index: {}]
  %s6 = sld [smem:[#allocation0]]
  $region42: #{tpu_custom_call.1} parent=0
    _
  %s8 = ssub.s32 1, %s6
  %s9 = scalar_select 0, %s8, %s6
  $region1: #{tpu_custom_call.1} parent=0
    #allocation2 [shape = 'u8[16384]{0}', space=vmem, size = 0x4000, scoped, tag = 'input window, operand 0, single buffered']
    #allocation3 [shape = 's32[1]{0}', space=sflag, size = 0x4, scoped, tag = 'scoped memory for tpu_custom_call.1']
    #allocation4 [shape = 's32[1]{0}', space=sflag, size = 0x4, scoped, tag = 'scoped memory for tpu_custom_call.1']
    #allocation5 [shape = 'u8[524288]{0}', space=vmem, size = 0x80000, scoped, tag = 'input window, operand 1, single buffered']
    #allocation6 [shape = 's32[1]{0}', space=sflag, size = 0x4, scoped, tag = 'scoped memory for tpu_custom_call.1']
    #allocation7 [shape = 'u8[131072]{0}', space=vmem, size = 0x20000, scoped, tag = 'input window, operand 3, single buffered']
    #allocation8 [shape = 'u8[4096]{0}', space=vmem, size = 0x1000, scoped, tag = 'output window, operand 0, single buffered']
    %10 = vsyncpa [#allocation3], 0
    %11 = vsyncpa [#allocation6], 0
    %12 = vsyncpa [#allocation4], 0
    // Predicated region
    $region2: #{tpu_custom_call.1} parent=1 // pred_check
      _
    $region3: #{tpu_custom_call.1} parent=1 // pred_check_branch
      %14 = sbr.rel (0) target = $region5
    $region4: #{tpu_custom_call.1} parent=1 // pred_region
      %s16 = ssub.s32 512, 512
      %17 = vsyncadd [#allocation3], %s16
      %s19 = sshll.u32 [#allocation2], 4
      %s20 = int_to_ptr.vmem [resolvable:$true] %s19
      %22 = dma.hbm_to_vmem [thread:$0]  %s0, 512, %s20, [#allocation3]
    $region5: #{tpu_custom_call.1} parent=1 // pred_fallthru
      _
    // Predicated region
    $region6: #{tpu_custom_call.1} parent=1 // pred_check
      _
    $region7: #{tpu_custom_call.1} parent=1 // pred_check_branch
      %24 = sbr.rel (0) target = $region9
    $region8: #{tpu_custom_call.1} parent=1 // pred_region
      %s26 = ssub.s32 16384, 16384
      %27 = vsyncadd [#allocation6], %s26
      %s28 = sshll.u32 [#allocation5], 4
      %s29 = int_to_ptr.vmem [resolvable:$true] %s28
      %34 = dma.hbm_to_vmem [thread:$0]  %s1, 16384, %s29, [#allocation6], 256, 256, 16
    $region9: #{tpu_custom_call.1} parent=1 // pred_fallthru
      _
    // Predicated region
    $region10: #{tpu_custom_call.1} parent=1 // pred_check
      _
    $region11: #{tpu_custom_call.1} parent=1 // pred_check_branch
      %36 = sbr.rel (0) target = $region13
    $region12: #{tpu_custom_call.1} parent=1 // pred_region
      _
    $region13: #{tpu_custom_call.1} parent=1 // pred_fallthru
      _
    // Predicated region
    $region14: #{tpu_custom_call.1} parent=1 // pred_check
      _
    $region15: #{tpu_custom_call.1} parent=1 // pred_check_branch
      %38 = sbr.rel (0) target = $region17
    $region16: #{tpu_custom_call.1} parent=1 // pred_region
      %s40 = ssub.s32 4096, 4096
      %41 = vsyncadd [#allocation6], %s40
      %s42 = sshll.u32 [#allocation7], 4
      %s43 = int_to_ptr.vmem [resolvable:$true] %s42
      %48 = dma.hbm_to_vmem [thread:$0]  %s3, 4096, %s43, [#allocation6], 64, 64, 4
    $region17: #{tpu_custom_call.1} parent=1 // pred_fallthru
      _
    // Predicated region
    $region18: #{tpu_custom_call.1} parent=1 // pred_check
      _
    $region19: #{tpu_custom_call.1} parent=1 // pred_check_branch
      %50 = sbr.rel (0) target = $region21
    $region20: #{tpu_custom_call.1} parent=1 // pred_region
      _
    $region21: #{tpu_custom_call.1} parent=1 // pred_fallthru
      _
    // Predicated region
    $region22: #{tpu_custom_call.1} parent=1 // pred_check
      _
    $region23: #{tpu_custom_call.1} parent=1 // pred_check_branch
      %52 = sbr.rel (0) target = $region25
    $region24: #{tpu_custom_call.1} parent=1 // pred_region
      %53 = dma.done [#allocation3], 512
    $region25: #{tpu_custom_call.1} parent=1 // pred_fallthru
      _
    // Predicated region
    $region26: #{tpu_custom_call.1} parent=1 // pred_check
      _
    $region27: #{tpu_custom_call.1} parent=1 // pred_check_branch
      %55 = sbr.rel (0) target = $region29
    $region28: #{tpu_custom_call.1} parent=1 // pred_region
      %56 = dma.done [#allocation6], 16384
    $region29: #{tpu_custom_call.1} parent=1 // pred_fallthru
      _
    // Predicated region
    $region30: #{tpu_custom_call.1} parent=1 // pred_check
      _
    $region31: #{tpu_custom_call.1} parent=1 // pred_check_branch
      %58 = sbr.rel (0) target = $region33
    $region32: #{tpu_custom_call.1} parent=1 // pred_region
      %59 = dma.done [#allocation6], 4096
    $region33: #{tpu_custom_call.1} parent=1 // pred_fallthru
      _
    %v61 = vld [vmem:[#allocation2] sm:$0xff]
    %v62 = vld [vmem:[#allocation2 + $0x8] sm:$0xff]
    %v63 = vld [vmem:[#allocation2 + $0x10] sm:$0xff]
    %v64 = vld [vmem:[#allocation2 + $0x18] sm:$0xff]
    %v65 = vmul.f32 %v61, %v61
    %v66 = vmul.f32 %v62, %v62
    %v67 = vmul.f32 %v63, %v63
    %v68 = vmul.f32 %v64, %v64
    %v69 = vadd.f32 %v65, %v66
    %v70 = vadd.f32 %v69, %v67
    %v71 = vadd.f32 %v70, %v68
    %72 = vadd.xlane.f32.xlu0 %v71
    %v73 = vpop.xlane.xlu0 %72
    %v74 = vmax.f32 %v73, 1e-24
    %v75 = vrsqrt.pop %v74
    %v76 = vpack.c.bf16 %v61, %v61
    %v77 = vpack.c.bf16 %v62, %v62
    %v78 = vpack.c.bf16 %v63, %v63
    %v79 = vpack.c.bf16 %v64, %v64
    %v80 = vld [vmem:[#allocation5] sm:$0xff]
    %v81 = vld [vmem:[#allocation5 + $0x8] sm:$0xff]
    %v82 = vld [vmem:[#allocation5 + $0x10] sm:$0xff]
    %v83 = vld [vmem:[#allocation5 + $0x18] sm:$0xff]
    %v84 = vld [vmem:[#allocation5 + $0x20] sm:$0xff]
    %v85 = vld [vmem:[#allocation5 + $0x28] sm:$0xff]
    %v86 = vld [vmem:[#allocation5 + $0x30] sm:$0xff]
    %v87 = vld [vmem:[#allocation5 + $0x38] sm:$0xff]
    %v88 = vld [vmem:[#allocation5 + $0x40] sm:$0xff]
    %v89 = vld [vmem:[#allocation5 + $0x48] sm:$0xff]
    %v90 = vld [vmem:[#allocation5 + $0x50] sm:$0xff]
    %v91 = vld [vmem:[#allocation5 + $0x58] sm:$0xff]
    %v92 = vld [vmem:[#allocation5 + $0x60] sm:$0xff]
    %v93 = vld [vmem:[#allocation5 + $0x68] sm:$0xff]
    %v94 = vld [vmem:[#allocation5 + $0x70] sm:$0xff]
    %v95 = vld [vmem:[#allocation5 + $0x78] sm:$0xff]
    %v96 = vld [vmem:[#allocation5 + $0x80] sm:$0xff]
    %v97 = vld [vmem:[#allocation5 + $0x88] sm:$0xff]
    %v98 = vld [vmem:[#allocation5 + $0x90] sm:$0xff]
    %v99 = vld [vmem:[#allocation5 + $0x98] sm:$0xff]
    %v100 = vld [vmem:[#allocation5 + $0xa0] sm:$0xff]
    %v101 = vld [vmem:[#allocation5 + $0xa8] sm:$0xff]
    %v102 = vld [vmem:[#allocation5 + $0xb0] sm:$0xff]
    %v103 = vld [vmem:[#allocation5 + $0xb8] sm:$0xff]
    %v104 = vld [vmem:[#allocation5 + $0xc0] sm:$0xff]
    %v105 = vld [vmem:[#allocation5 + $0xc8] sm:$0xff]
    %v106 = vld [vmem:[#allocation5 + $0xd0] sm:$0xff]
    %v107 = vld [vmem:[#allocation5 + $0xd8] sm:$0xff]
    %v108 = vld [vmem:[#allocation5 + $0xe0] sm:$0xff]
    %v109 = vld [vmem:[#allocation5 + $0xe8] sm:$0xff]
    %v110 = vld [vmem:[#allocation5 + $0xf0] sm:$0xff]
    %v111 = vld [vmem:[#allocation5 + $0xf8] sm:$0xff]
    %v112 = vld [vmem:[#allocation5 + $0x100] sm:$0xff]
    %v113 = vld [vmem:[#allocation5 + $0x108] sm:$0xff]
    %v114 = vld [vmem:[#allocation5 + $0x110] sm:$0xff]
    %v115 = vld [vmem:[#allocation5 + $0x118] sm:$0xff]
    %v116 = vld [vmem:[#allocation5 + $0x120] sm:$0xff]
    %v117 = vld [vmem:[#allocation5 + $0x128] sm:$0xff]
    %v118 = vld [vmem:[#allocation5 + $0x130] sm:$0xff]
    %v119 = vld [vmem:[#allocation5 + $0x138] sm:$0xff]
    %v120 = vld [vmem:[#allocation5 + $0x140] sm:$0xff]
    %v121 = vld [vmem:[#allocation5 + $0x148] sm:$0xff]
    %v122 = vld [vmem:[#allocation5 + $0x150] sm:$0xff]
    %v123 = vld [vmem:[#allocation5 + $0x158] sm:$0xff]
    %v124 = vld [vmem:[#allocation5 + $0x160] sm:$0xff]
    %v125 = vld [vmem:[#allocation5 + $0x168] sm:$0xff]
    %v126 = vld [vmem:[#allocation5 + $0x170] sm:$0xff]
    %v127 = vld [vmem:[#allocation5 + $0x178] sm:$0xff]
    %v128 = vld [vmem:[#allocation5 + $0x180] sm:$0xff]
    %v129 = vld [vmem:[#allocation5 + $0x188] sm:$0xff]
    %v130 = vld [vmem:[#allocation5 + $0x190] sm:$0xff]
    %v131 = vld [vmem:[#allocation5 + $0x198] sm:$0xff]
    %v132 = vld [vmem:[#allocation5 + $0x1a0] sm:$0xff]
    %v133 = vld [vmem:[#allocation5 + $0x1a8] sm:$0xff]
    %v134 = vld [vmem:[#allocation5 + $0x1b0] sm:$0xff]
    %v135 = vld [vmem:[#allocation5 + $0x1b8] sm:$0xff]
    %v136 = vld [vmem:[#allocation5 + $0x1c0] sm:$0xff]
    %v137 = vld [vmem:[#allocation5 + $0x1c8] sm:$0xff]
    %v138 = vld [vmem:[#allocation5 + $0x1d0] sm:$0xff]
    %v139 = vld [vmem:[#allocation5 + $0x1d8] sm:$0xff]
    %v140 = vld [vmem:[#allocation5 + $0x1e0] sm:$0xff]
    %v141 = vld [vmem:[#allocation5 + $0x1e8] sm:$0xff]
    %v142 = vld [vmem:[#allocation5 + $0x1f0] sm:$0xff]
    %v143 = vld [vmem:[#allocation5 + $0x1f8] sm:$0xff]
    %v144 = vld [vmem:[#allocation5 + $0x200] sm:$0xff]
    %v145 = vld [vmem:[#allocation5 + $0x208] sm:$0xff]
    %v146 = vld [vmem:[#allocation5 + $0x210] sm:$0xff]
    %v147 = vld [vmem:[#allocation5 + $0x218] sm:$0xff]
    %v148 = vld [vmem:[#allocation5 + $0x220] sm:$0xff]
    %v149 = vld [vmem:[#allocation5 + $0x228] sm:$0xff]
    %v150 = vld [vmem:[#allocation5 + $0x230] sm:$0xff]
    %v151 = vld [vmem:[#allocation5 + $0x238] sm:$0xff]
    %v152 = vld [vmem:[#allocation5 + $0x240] sm:$0xff]
    %v153 = vld [vmem:[#allocation5 + $0x248] sm:$0xff]
    %v154 = vld [vmem:[#allocation5 + $0x250] sm:$0xff]
    %v155 = vld [vmem:[#allocation5 + $0x258] sm:$0xff]
    %v156 = vld [vmem:[#allocation5 + $0x260] sm:$0xff]
    %v157 = vld [vmem:[#allocation5 + $0x268] sm:$0xff]
    %v158 = vld [vmem:[#allocation5 + $0x270] sm:$0xff]
    %v159 = vld [vmem:[#allocation5 + $0x278] sm:$0xff]
    %v160 = vld [vmem:[#allocation5 + $0x280] sm:$0xff]
    %v161 = vld [vmem:[#allocation5 + $0x288] sm:$0xff]
    %v162 = vld [vmem:[#allocation5 + $0x290] sm:$0xff]
    %v163 = vld [vmem:[#allocation5 + $0x298] sm:$0xff]
    %v164 = vld [vmem:[#allocation5 + $0x2a0] sm:$0xff]
    %v165 = vld [vmem:[#allocation5 + $0x2a8] sm:$0xff]
    %v166 = vld [vmem:[#allocation5 + $0x2b0] sm:$0xff]
    %v167 = vld [vmem:[#allocation5 + $0x2b8] sm:$0xff]
    %v168 = vld [vmem:[#allocation5 + $0x2c0] sm:$0xff]
    %v169 = vld [vmem:[#allocation5 + $0x2c8] sm:$0xff]
    %v170 = vld [vmem:[#allocation5 + $0x2d0] sm:$0xff]
    %v171 = vld [vmem:[#allocation5 + $0x2d8] sm:$0xff]
    %v172 = vld [vmem:[#allocation5 + $0x2e0] sm:$0xff]
    %v173 = vld [vmem:[#allocation5 + $0x2e8] sm:$0xff]
    %v174 = vld [vmem:[#allocation5 + $0x2f0] sm:$0xff]
    %v175 = vld [vmem:[#allocation5 + $0x2f8] sm:$0xff]
    %v176 = vld [vmem:[#allocation5 + $0x300] sm:$0xff]
    %v177 = vld [vmem:[#allocation5 + $0x308] sm:$0xff]
    %v178 = vld [vmem:[#allocation5 + $0x310] sm:$0xff]
    %v179 = vld [vmem:[#allocation5 + $0x318] sm:$0xff]
    %v180 = vld [vmem:[#allocation5 + $0x320] sm:$0xff]
    %v181 = vld [vmem:[#allocation5 + $0x328] sm:$0xff]
    %v182 = vld [vmem:[#allocation5 + $0x330] sm:$0xff]
    %v183 = vld [vmem:[#allocation5 + $0x338] sm:$0xff]
    %v184 = vld [vmem:[#allocation5 + $0x340] sm:$0xff]
    %v185 = vld [vmem:[#allocation5 + $0x348] sm:$0xff]
    %v186 = vld [vmem:[#allocation5 + $0x350] sm:$0xff]
    %v187 = vld [vmem:[#allocation5 + $0x358] sm:$0xff]
    %v188 = vld [vmem:[#allocation5 + $0x360] sm:$0xff]
    %v189 = vld [vmem:[#allocation5 + $0x368] sm:$0xff]
    %v190 = vld [vmem:[#allocation5 + $0x370] sm:$0xff]
    %v191 = vld [vmem:[#allocation5 + $0x378] sm:$0xff]
    %v192 = vld [vmem:[#allocation5 + $0x380] sm:$0xff]
    %v193 = vld [vmem:[#allocation5 + $0x388] sm:$0xff]
    %v194 = vld [vmem:[#allocation5 + $0x390] sm:$0xff]
    %v195 = vld [vmem:[#allocation5 + $0x398] sm:$0xff]
    %v196 = vld [vmem:[#allocation5 + $0x3a0] sm:$0xff]
    %v197 = vld [vmem:[#allocation5 + $0x3a8] sm:$0xff]
    %v198 = vld [vmem:[#allocation5 + $0x3b0] sm:$0xff]
    %v199 = vld [vmem:[#allocation5 + $0x3b8] sm:$0xff]
    %v200 = vld [vmem:[#allocation5 + $0x3c0] sm:$0xff]
    %v201 = vld [vmem:[#allocation5 + $0x3c8] sm:$0xff]
    %v202 = vld [vmem:[#allocation5 + $0x3d0] sm:$0xff]
    %v203 = vld [vmem:[#allocation5 + $0x3d8] sm:$0xff]
    %v204 = vld [vmem:[#allocation5 + $0x3e0] sm:$0xff]
    %v205 = vld [vmem:[#allocation5 + $0x3e8] sm:$0xff]
    %v206 = vld [vmem:[#allocation5 + $0x3f0] sm:$0xff]
    %v207 = vld [vmem:[#allocation5 + $0x3f8] sm:$0xff]
    %v336 = vunpack.c.l.b16 %v80
    %v337 = vunpack.c.h.b16 %v80
    %v338 = vunpack.c.l.b16 %v81
    %v339 = vunpack.c.h.b16 %v81
    %v340 = vunpack.c.l.b16 %v82
    %v341 = vunpack.c.h.b16 %v82
    %v342 = vunpack.c.l.b16 %v83
    %v343 = vunpack.c.h.b16 %v83
    %v344 = vunpack.c.l.b16 %v84
    %v345 = vunpack.c.h.b16 %v84
    %v346 = vunpack.c.l.b16 %v85
    %v347 = vunpack.c.h.b16 %v85
    %v348 = vunpack.c.l.b16 %v86
    %v349 = vunpack.c.h.b16 %v86
    %v350 = vunpack.c.l.b16 %v87
    %v351 = vunpack.c.h.b16 %v87
    %v352 = vunpack.c.l.b16 %v88
    %v353 = vunpack.c.h.b16 %v88
    %v354 = vunpack.c.l.b16 %v89
    %v355 = vunpack.c.h.b16 %v89
    %v356 = vunpack.c.l.b16 %v90
    %v357 = vunpack.c.h.b16 %v90
    %v358 = vunpack.c.l.b16 %v91
    %v359 = vunpack.c.h.b16 %v91
    %v360 = vunpack.c.l.b16 %v92
    %v361 = vunpack.c.h.b16 %v92
    %v362 = vunpack.c.l.b16 %v93
    %v363 = vunpack.c.h.b16 %v93
    %v364 = vunpack.c.l.b16 %v94
    %v365 = vunpack.c.h.b16 %v94
    %v366 = vunpack.c.l.b16 %v95
    %v367 = vunpack.c.h.b16 %v95
    %v368 = vunpack.c.l.b16 %v96
    %v369 = vunpack.c.h.b16 %v96
    %v370 = vunpack.c.l.b16 %v97
    %v371 = vunpack.c.h.b16 %v97
    %v372 = vunpack.c.l.b16 %v98
    %v373 = vunpack.c.h.b16 %v98
    %v374 = vunpack.c.l.b16 %v99
    %v375 = vunpack.c.h.b16 %v99
    %v376 = vunpack.c.l.b16 %v100
    %v377 = vunpack.c.h.b16 %v100
    %v378 = vunpack.c.l.b16 %v101
    %v379 = vunpack.c.h.b16 %v101
    %v380 = vunpack.c.l.b16 %v102
    %v381 = vunpack.c.h.b16 %v102
    %v382 = vunpack.c.l.b16 %v103
    %v383 = vunpack.c.h.b16 %v103
    %v384 = vunpack.c.l.b16 %v104
    %v385 = vunpack.c.h.b16 %v104
    %v386 = vunpack.c.l.b16 %v105
    %v387 = vunpack.c.h.b16 %v105
    %v388 = vunpack.c.l.b16 %v106
    %v389 = vunpack.c.h.b16 %v106
    %v390 = vunpack.c.l.b16 %v107
    %v391 = vunpack.c.h.b16 %v107
    %v392 = vunpack.c.l.b16 %v108
    %v393 = vunpack.c.h.b16 %v108
    %v394 = vunpack.c.l.b16 %v109
    %v395 = vunpack.c.h.b16 %v109
    %v396 = vunpack.c.l.b16 %v110
    %v397 = vunpack.c.h.b16 %v110
    %v398 = vunpack.c.l.b16 %v111
    %v399 = vunpack.c.h.b16 %v111
    %v400 = vunpack.c.l.b16 %v112
    %v401 = vunpack.c.h.b16 %v112
    %v402 = vunpack.c.l.b16 %v113
    %v403 = vunpack.c.h.b16 %v113
    %v404 = vunpack.c.l.b16 %v114
    %v405 = vunpack.c.h.b16 %v114
    %v406 = vunpack.c.l.b16 %v115
    %v407 = vunpack.c.h.b16 %v115
    %v408 = vunpack.c.l.b16 %v116
    %v409 = vunpack.c.h.b16 %v116
    %v410 = vunpack.c.l.b16 %v117
    %v411 = vunpack.c.h.b16 %v117
    %v412 = vunpack.c.l.b16 %v118
    %v413 = vunpack.c.h.b16 %v118
    %v414 = vunpack.c.l.b16 %v119
    %v415 = vunpack.c.h.b16 %v119
    %v416 = vunpack.c.l.b16 %v120
    %v417 = vunpack.c.h.b16 %v120
    %v418 = vunpack.c.l.b16 %v121
    %v419 = vunpack.c.h.b16 %v121
    %v420 = vunpack.c.l.b16 %v122
    %v421 = vunpack.c.h.b16 %v122
    %v422 = vunpack.c.l.b16 %v123
    %v423 = vunpack.c.h.b16 %v123
    %v424 = vunpack.c.l.b16 %v124
    %v425 = vunpack.c.h.b16 %v124
    %v426 = vunpack.c.l.b16 %v125
    %v427 = vunpack.c.h.b16 %v125
    %v428 = vunpack.c.l.b16 %v126
    %v429 = vunpack.c.h.b16 %v126
    %v430 = vunpack.c.l.b16 %v127
    %v431 = vunpack.c.h.b16 %v127
    %v432 = vunpack.c.l.b16 %v128
    %v433 = vunpack.c.h.b16 %v128
    %v434 = vunpack.c.l.b16 %v129
    %v435 = vunpack.c.h.b16 %v129
    %v436 = vunpack.c.l.b16 %v130
    %v437 = vunpack.c.h.b16 %v130
    %v438 = vunpack.c.l.b16 %v131
    %v439 = vunpack.c.h.b16 %v131
    %v440 = vunpack.c.l.b16 %v132
    %v441 = vunpack.c.h.b16 %v132
    %v442 = vunpack.c.l.b16 %v133
    %v443 = vunpack.c.h.b16 %v133
    %v444 = vunpack.c.l.b16 %v134
    %v445 = vunpack.c.h.b16 %v134
    %v446 = vunpack.c.l.b16 %v135
    %v447 = vunpack.c.h.b16 %v135
    %v448 = vunpack.c.l.b16 %v136
    %v449 = vunpack.c.h.b16 %v136
    %v450 = vunpack.c.l.b16 %v137
    %v451 = vunpack.c.h.b16 %v137
    %v452 = vunpack.c.l.b16 %v138
    %v453 = vunpack.c.h.b16 %v138
    %v454 = vunpack.c.l.b16 %v139
    %v455 = vunpack.c.h.b16 %v139
    %v456 = vunpack.c.l.b16 %v140
    %v457 = vunpack.c.h.b16 %v140
    %v458 = vunpack.c.l.b16 %v141
    %v459 = vunpack.c.h.b16 %v141
    %v460 = vunpack.c.l.b16 %v142
    %v461 = vunpack.c.h.b16 %v142
    %v462 = vunpack.c.l.b16 %v143
    %v463 = vunpack.c.h.b16 %v143
    %v464 = vunpack.c.l.b16 %v144
    %v465 = vunpack.c.h.b16 %v144
    %v466 = vunpack.c.l.b16 %v145
    %v467 = vunpack.c.h.b16 %v145
    %v468 = vunpack.c.l.b16 %v146
    %v469 = vunpack.c.h.b16 %v146
    %v470 = vunpack.c.l.b16 %v147
    %v471 = vunpack.c.h.b16 %v147
    %v472 = vunpack.c.l.b16 %v148
    %v473 = vunpack.c.h.b16 %v148
    %v474 = vunpack.c.l.b16 %v149
    %v475 = vunpack.c.h.b16 %v149
    %v476 = vunpack.c.l.b16 %v150
    %v477 = vunpack.c.h.b16 %v150
    %v478 = vunpack.c.l.b16 %v151
    %v479 = vunpack.c.h.b16 %v151
    %v480 = vunpack.c.l.b16 %v152
    %v481 = vunpack.c.h.b16 %v152
    %v482 = vunpack.c.l.b16 %v153
    %v483 = vunpack.c.h.b16 %v153
    %v484 = vunpack.c.l.b16 %v154
    %v485 = vunpack.c.h.b16 %v154
    %v486 = vunpack.c.l.b16 %v155
    %v487 = vunpack.c.h.b16 %v155
    %v488 = vunpack.c.l.b16 %v156
    %v489 = vunpack.c.h.b16 %v156
    %v490 = vunpack.c.l.b16 %v157
    %v491 = vunpack.c.h.b16 %v157
    %v492 = vunpack.c.l.b16 %v158
    %v493 = vunpack.c.h.b16 %v158
    %v494 = vunpack.c.l.b16 %v159
    %v495 = vunpack.c.h.b16 %v159
    %v496 = vunpack.c.l.b16 %v160
    %v497 = vunpack.c.h.b16 %v160
    %v498 = vunpack.c.l.b16 %v161
    %v499 = vunpack.c.h.b16 %v161
    %v500 = vunpack.c.l.b16 %v162
    %v501 = vunpack.c.h.b16 %v162
    %v502 = vunpack.c.l.b16 %v163
    %v503 = vunpack.c.h.b16 %v163
    %v504 = vunpack.c.l.b16 %v164
    %v505 = vunpack.c.h.b16 %v164
    %v506 = vunpack.c.l.b16 %v165
    %v507 = vunpack.c.h.b16 %v165
    %v508 = vunpack.c.l.b16 %v166
    %v509 = vunpack.c.h.b16 %v166
    %v510 = vunpack.c.l.b16 %v167
    %v511 = vunpack.c.h.b16 %v167
    %v512 = vunpack.c.l.b16 %v168
    %v513 = vunpack.c.h.b16 %v168
    %v514 = vunpack.c.l.b16 %v169
    %v515 = vunpack.c.h.b16 %v169
    %v516 = vunpack.c.l.b16 %v170
    %v517 = vunpack.c.h.b16 %v170
    %v518 = vunpack.c.l.b16 %v171
    %v519 = vunpack.c.h.b16 %v171
    %v520 = vunpack.c.l.b16 %v172
    %v521 = vunpack.c.h.b16 %v172
    %v522 = vunpack.c.l.b16 %v173
    %v523 = vunpack.c.h.b16 %v173
    %v524 = vunpack.c.l.b16 %v174
    %v525 = vunpack.c.h.b16 %v174
    %v526 = vunpack.c.l.b16 %v175
    %v527 = vunpack.c.h.b16 %v175
    %v528 = vunpack.c.l.b16 %v176
    %v529 = vunpack.c.h.b16 %v176
    %v530 = vunpack.c.l.b16 %v177
    %v531 = vunpack.c.h.b16 %v177
    %v532 = vunpack.c.l.b16 %v178
    %v533 = vunpack.c.h.b16 %v178
    %v534 = vunpack.c.l.b16 %v179
    %v535 = vunpack.c.h.b16 %v179
    %v536 = vunpack.c.l.b16 %v180
    %v537 = vunpack.c.h.b16 %v180
    %v538 = vunpack.c.l.b16 %v181
    %v539 = vunpack.c.h.b16 %v181
    %v540 = vunpack.c.l.b16 %v182
    %v541 = vunpack.c.h.b16 %v182
    %v542 = vunpack.c.l.b16 %v183
    %v543 = vunpack.c.h.b16 %v183
    %v544 = vunpack.c.l.b16 %v184
    %v545 = vunpack.c.h.b16 %v184
    %v546 = vunpack.c.l.b16 %v185
    %v547 = vunpack.c.h.b16 %v185
    %v548 = vunpack.c.l.b16 %v186
    %v549 = vunpack.c.h.b16 %v186
    %v550 = vunpack.c.l.b16 %v187
    %v551 = vunpack.c.h.b16 %v187
    %v552 = vunpack.c.l.b16 %v188
    %v553 = vunpack.c.h.b16 %v188
    %v554 = vunpack.c.l.b16 %v189
    %v555 = vunpack.c.h.b16 %v189
    %v556 = vunpack.c.l.b16 %v190
    %v557 = vunpack.c.h.b16 %v190
    %v558 = vunpack.c.l.b16 %v191
    %v559 = vunpack.c.h.b16 %v191
    %v560 = vunpack.c.l.b16 %v192
    %v561 = vunpack.c.h.b16 %v192
    %v562 = vunpack.c.l.b16 %v193
    %v563 = vunpack.c.h.b16 %v193
    %v564 = vunpack.c.l.b16 %v194
    %v565 = vunpack.c.h.b16 %v194
    %v566 = vunpack.c.l.b16 %v195
    %v567 = vunpack.c.h.b16 %v195
    %v568 = vunpack.c.l.b16 %v196
    %v569 = vunpack.c.h.b16 %v196
    %v570 = vunpack.c.l.b16 %v197
    %v571 = vunpack.c.h.b16 %v197
    %v572 = vunpack.c.l.b16 %v198
    %v573 = vunpack.c.h.b16 %v198
    %v574 = vunpack.c.l.b16 %v199
    %v575 = vunpack.c.h.b16 %v199
    %v576 = vunpack.c.l.b16 %v200
    %v577 = vunpack.c.h.b16 %v200
    %v578 = vunpack.c.l.b16 %v201
    %v579 = vunpack.c.h.b16 %v201
    %v580 = vunpack.c.l.b16 %v202
    %v581 = vunpack.c.h.b16 %v202
    %v582 = vunpack.c.l.b16 %v203
    %v583 = vunpack.c.h.b16 %v203
    %v584 = vunpack.c.l.b16 %v204
    %v585 = vunpack.c.h.b16 %v204
    %v586 = vunpack.c.l.b16 %v205
    %v587 = vunpack.c.h.b16 %v205
    %v588 = vunpack.c.l.b16 %v206
    %v589 = vunpack.c.h.b16 %v206
    %v590 = vunpack.c.l.b16 %v207
    %v591 = vunpack.c.h.b16 %v207
    %v592 = vpack.c.b16 %v340, %v336
    %v593 = vpack.c.b16 %v341, %v337
    %v594 = vpack.c.b16 %v342, %v338
    %v595 = vpack.c.b16 %v343, %v339
    %v596 = vpack.c.b16 %v348, %v344
    %v597 = vpack.c.b16 %v349, %v345
    %v598 = vpack.c.b16 %v350, %v346
    %v599 = vpack.c.b16 %v351, %v347
    %v600 = vpack.c.b16 %v356, %v352
    %v601 = vpack.c.b16 %v357, %v353
    %v602 = vpack.c.b16 %v358, %v354
    %v603 = vpack.c.b16 %v359, %v355
    %v604 = vpack.c.b16 %v364, %v360
    %v605 = vpack.c.b16 %v365, %v361
    %v606 = vpack.c.b16 %v366, %v362
    %v607 = vpack.c.b16 %v367, %v363
    %v608 = vpack.c.b16 %v372, %v368
    %v609 = vpack.c.b16 %v373, %v369
    %v610 = vpack.c.b16 %v374, %v370
    %v611 = vpack.c.b16 %v375, %v371
    %v612 = vpack.c.b16 %v380, %v376
    %v613 = vpack.c.b16 %v381, %v377
    %v614 = vpack.c.b16 %v382, %v378
    %v615 = vpack.c.b16 %v383, %v379
    %v616 = vpack.c.b16 %v388, %v384
    %v617 = vpack.c.b16 %v389, %v385
    %v618 = vpack.c.b16 %v390, %v386
    %v619 = vpack.c.b16 %v391, %v387
    %v620 = vpack.c.b16 %v396, %v392
    %v621 = vpack.c.b16 %v397, %v393
    %v622 = vpack.c.b16 %v398, %v394
    %v623 = vpack.c.b16 %v399, %v395
    %v624 = vpack.c.b16 %v404, %v400
    %v625 = vpack.c.b16 %v405, %v401
    %v626 = vpack.c.b16 %v406, %v402
    %v627 = vpack.c.b16 %v407, %v403
    %v628 = vpack.c.b16 %v412, %v408
    %v629 = vpack.c.b16 %v413, %v409
    %v630 = vpack.c.b16 %v414, %v410
    %v631 = vpack.c.b16 %v415, %v411
    %v632 = vpack.c.b16 %v420, %v416
    %v633 = vpack.c.b16 %v421, %v417
    %v634 = vpack.c.b16 %v422, %v418
    %v635 = vpack.c.b16 %v423, %v419
    %v636 = vpack.c.b16 %v428, %v424
    %v637 = vpack.c.b16 %v429, %v425
    %v638 = vpack.c.b16 %v430, %v426
    %v639 = vpack.c.b16 %v431, %v427
    %v640 = vpack.c.b16 %v436, %v432
    %v641 = vpack.c.b16 %v437, %v433
    %v642 = vpack.c.b16 %v438, %v434
    %v643 = vpack.c.b16 %v439, %v435
    %v644 = vpack.c.b16 %v444, %v440
    %v645 = vpack.c.b16 %v445, %v441
    %v646 = vpack.c.b16 %v446, %v442
    %v647 = vpack.c.b16 %v447, %v443
    %v648 = vpack.c.b16 %v452, %v448
    %v649 = vpack.c.b16 %v453, %v449
    %v650 = vpack.c.b16 %v454, %v450
    %v651 = vpack.c.b16 %v455, %v451
    %v652 = vpack.c.b16 %v460, %v456
    %v653 = vpack.c.b16 %v461, %v457
    %v654 = vpack.c.b16 %v462, %v458
    %v655 = vpack.c.b16 %v463, %v459
    %v656 = vpack.c.b16 %v468, %v464
    %v657 = vpack.c.b16 %v469, %v465
    %v658 = vpack.c.b16 %v470, %v466
    %v659 = vpack.c.b16 %v471, %v467
    %v660 = vpack.c.b16 %v476, %v472
    %v661 = vpack.c.b16 %v477, %v473
    %v662 = vpack.c.b16 %v478, %v474
    %v663 = vpack.c.b16 %v479, %v475
    %v664 = vpack.c.b16 %v484, %v480
    %v665 = vpack.c.b16 %v485, %v481
    %v666 = vpack.c.b16 %v486, %v482
    %v667 = vpack.c.b16 %v487, %v483
    %v668 = vpack.c.b16 %v492, %v488
    %v669 = vpack.c.b16 %v493, %v489
    %v670 = vpack.c.b16 %v494, %v490
    %v671 = vpack.c.b16 %v495, %v491
    %v672 = vpack.c.b16 %v500, %v496
    %v673 = vpack.c.b16 %v501, %v497
    %v674 = vpack.c.b16 %v502, %v498
    %v675 = vpack.c.b16 %v503, %v499
    %v676 = vpack.c.b16 %v508, %v504
    %v677 = vpack.c.b16 %v509, %v505
    %v678 = vpack.c.b16 %v510, %v506
    %v679 = vpack.c.b16 %v511, %v507
    %v680 = vpack.c.b16 %v516, %v512
    %v681 = vpack.c.b16 %v517, %v513
    %v682 = vpack.c.b16 %v518, %v514
    %v683 = vpack.c.b16 %v519, %v515
    %v684 = vpack.c.b16 %v524, %v520
    %v685 = vpack.c.b16 %v525, %v521
    %v686 = vpack.c.b16 %v526, %v522
    %v687 = vpack.c.b16 %v527, %v523
    %v688 = vpack.c.b16 %v532, %v528
    %v689 = vpack.c.b16 %v533, %v529
    %v690 = vpack.c.b16 %v534, %v530
    %v691 = vpack.c.b16 %v535, %v531
    %v692 = vpack.c.b16 %v540, %v536
    %v693 = vpack.c.b16 %v541, %v537
    %v694 = vpack.c.b16 %v542, %v538
    %v695 = vpack.c.b16 %v543, %v539
    %v696 = vpack.c.b16 %v548, %v544
    %v697 = vpack.c.b16 %v549, %v545
    %v698 = vpack.c.b16 %v550, %v546
    %v699 = vpack.c.b16 %v551, %v547
    %v700 = vpack.c.b16 %v556, %v552
    %v701 = vpack.c.b16 %v557, %v553
    %v702 = vpack.c.b16 %v558, %v554
    %v703 = vpack.c.b16 %v559, %v555
    %v704 = vpack.c.b16 %v564, %v560
    %v705 = vpack.c.b16 %v565, %v561
    %v706 = vpack.c.b16 %v566, %v562
    %v707 = vpack.c.b16 %v567, %v563
    %v708 = vpack.c.b16 %v572, %v568
    %v709 = vpack.c.b16 %v573, %v569
    %v710 = vpack.c.b16 %v574, %v570
    %v711 = vpack.c.b16 %v575, %v571
    %v712 = vpack.c.b16 %v580, %v576
    %v713 = vpack.c.b16 %v581, %v577
    %v714 = vpack.c.b16 %v582, %v578
    %v715 = vpack.c.b16 %v583, %v579
    %v716 = vpack.c.b16 %v588, %v584
    %v717 = vpack.c.b16 %v589, %v585
    %v718 = vpack.c.b16 %v590, %v586
    %v719 = vpack.c.b16 %v591, %v587
    %848 = vmatprep.subr.bf16.mxu0 %v593
    %849 = vmatpush1.bf16.msra.mxu0 %v592
    %850 = vmatprep.subr.bf16.mxu0 %v597
    %851 = vmatpush1.bf16.msra.mxu0 %v596
    %852 = vmatprep.subr.bf16.mxu0 %v601
    %853 = vmatpush1.bf16.msra.mxu0 %v600
    %854 = vmatprep.subr.bf16.mxu0 %v605
    %855 = vmatpush1.bf16.msra.mxu0 %v604
    %856 = vmatprep.subr.bf16.mxu0 %v609
    %857 = vmatpush1.bf16.msra.mxu0 %v608
    %858 = vmatprep.subr.bf16.mxu0 %v613
    %859 = vmatpush1.bf16.msra.mxu0 %v612
    %860 = vmatprep.subr.bf16.mxu0 %v617
    %861 = vmatpush1.bf16.msra.mxu0 %v616
    %862 = vmatprep.subr.bf16.mxu0 %v621
    %863 = vmatpush1.bf16.msra.mxu0 %v620
    %864 = vmatprep.subr.bf16.mxu0 %v625
    %865 = vmatpush1.bf16.msra.mxu0 %v624
    %866 = vmatprep.subr.bf16.mxu0 %v629
    %867 = vmatpush1.bf16.msra.mxu0 %v628
    %868 = vmatprep.subr.bf16.mxu0 %v633
    %869 = vmatpush1.bf16.msra.mxu0 %v632
    %870 = vmatprep.subr.bf16.mxu0 %v637
    %871 = vmatpush1.bf16.msra.mxu0 %v636
    %872 = vmatprep.subr.bf16.mxu0 %v641
    %873 = vmatpush1.bf16.msra.mxu0 %v640
    %874 = vmatprep.subr.bf16.mxu0 %v645
    %875 = vmatpush1.bf16.msra.mxu0 %v644
    %876 = vmatprep.subr.bf16.mxu0 %v649
    %877 = vmatpush1.bf16.msra.mxu0 %v648
    %878 = vmatprep.subr.bf16.mxu0 %v653
    %879 = vmatpush1.bf16.msra.mxu0 %v652
    %880 = vmatprep.mubr.bf16.mxu0 %v77
    %881 = vmatmul.mubr.bf16.gmra.mrb[0].mxu0 %v76
    %v882 = vpop.f32.mrb[0].mxu0
    %v883 = vadd.f32 0.0, %v882
    %v884 = vpop.f32.mrb[0].mxu0
    %v885 = vadd.f32 0.0, %v884
    %v886 = vpop.f32.mrb[0].mxu0
    %v887 = vpop.f32.mrb[0].mxu0
    %888 = vdwg.mxu0
    %889 = vmatprep.subr.bf16.mxu0 %v657
    %890 = vmatpush1.bf16.msra.mxu0 %v656
    %891 = vmatprep.subr.bf16.mxu0 %v661
    %892 = vmatpush1.bf16.msra.mxu0 %v660
    %893 = vmatprep.subr.bf16.mxu0 %v665
    %894 = vmatpush1.bf16.msra.mxu0 %v664
    %895 = vmatprep.subr.bf16.mxu0 %v669
    %896 = vmatpush1.bf16.msra.mxu0 %v668
    %897 = vmatprep.subr.bf16.mxu0 %v673
    %898 = vmatpush1.bf16.msra.mxu0 %v672
    %899 = vmatprep.subr.bf16.mxu0 %v677
    %900 = vmatpush1.bf16.msra.mxu0 %v676
    %901 = vmatprep.subr.bf16.mxu0 %v681
    %902 = vmatpush1.bf16.msra.mxu0 %v680
    %903 = vmatprep.subr.bf16.mxu0 %v685
    %904 = vmatpush1.bf16.msra.mxu0 %v684
    %905 = vmatprep.subr.bf16.mxu0 %v689
    %906 = vmatpush1.bf16.msra.mxu0 %v688
    %907 = vmatprep.subr.bf16.mxu0 %v693
    %908 = vmatpush1.bf16.msra.mxu0 %v692
    %909 = vmatprep.subr.bf16.mxu0 %v697
    %910 = vmatpush1.bf16.msra.mxu0 %v696
    %911 = vmatprep.subr.bf16.mxu0 %v701
    %912 = vmatpush1.bf16.msra.mxu0 %v700
    %913 = vmatprep.subr.bf16.mxu0 %v705
    %914 = vmatpush1.bf16.msra.mxu0 %v704
    %915 = vmatprep.subr.bf16.mxu0 %v709
    %916 = vmatpush1.bf16.msra.mxu0 %v708
    %917 = vmatprep.subr.bf16.mxu0 %v713
    %918 = vmatpush1.bf16.msra.mxu0 %v712
    %919 = vmatprep.subr.bf16.mxu0 %v717
    %920 = vmatpush1.bf16.msra.mxu0 %v716
    %921 = vmatprep.mubr.bf16.mxu0 %v79
    %922 = vmatmul.mubr.bf16.gmra.mrb[0].mxu0 %v78
    %v923 = vpop.f32.mrb[0].mxu0
    %v924 = vadd.f32 %v883, %v923
    %v925 = vpop.f32.mrb[0].mxu0
    %v926 = vadd.f32 %v885, %v925
    %v927 = vpop.f32.mrb[0].mxu0
    %v928 = vpop.f32.mrb[0].mxu0
    %929 = vdwg.mxu0
    %930 = vmatprep.subr.bf16.mxu0 %v595
    %931 = vmatpush1.bf16.msra.mxu0 %v594
    %932 = vmatprep.subr.bf16.mxu0 %v599
    %933 = vmatpush1.bf16.msra.mxu0 %v598
    %934 = vmatprep.subr.bf16.mxu0 %v603
    %935 = vmatpush1.bf16.msra.mxu0 %v602
    %936 = vmatprep.subr.bf16.mxu0 %v607
    %937 = vmatpush1.bf16.msra.mxu0 %v606
    %938 = vmatprep.subr.bf16.mxu0 %v611
    %939 = vmatpush1.bf16.msra.mxu0 %v610
    %940 = vmatprep.subr.bf16.mxu0 %v615
    %941 = vmatpush1.bf16.msra.mxu0 %v614
    %942 = vmatprep.subr.bf16.mxu0 %v619
    %943 = vmatpush1.bf16.msra.mxu0 %v618
    %944 = vmatprep.subr.bf16.mxu0 %v623
    %945 = vmatpush1.bf16.msra.mxu0 %v622
    %946 = vmatprep.subr.bf16.mxu0 %v627
    %947 = vmatpush1.bf16.msra.mxu0 %v626
    %948 = vmatprep.subr.bf16.mxu0 %v631
    %949 = vmatpush1.bf16.msra.mxu0 %v630
    %950 = vmatprep.subr.bf16.mxu0 %v635
    %951 = vmatpush1.bf16.msra.mxu0 %v634
    %952 = vmatprep.subr.bf16.mxu0 %v639
    %953 = vmatpush1.bf16.msra.mxu0 %v638
    %954 = vmatprep.subr.bf16.mxu0 %v643
    %955 = vmatpush1.bf16.msra.mxu0 %v642
    %956 = vmatprep.subr.bf16.mxu0 %v647
    %957 = vmatpush1.bf16.msra.mxu0 %v646
    %958 = vmatprep.subr.bf16.mxu0 %v651
    %959 = vmatpush1.bf16.msra.mxu0 %v650
    %960 = vmatprep.subr.bf16.mxu0 %v655
    %961 = vmatpush1.bf16.msra.mxu0 %v654
    %962 = vmatprep.mubr.bf16.mxu0 %v77
    %963 = vmatmul.mubr.bf16.gmra.mrb[0].mxu0 %v76
    %v964 = vpop.f32.mrb[0].mxu0
    %v965 = vadd.f32 0.0, %v964
    %v966 = vpop.f32.mrb[0].mxu0
    %v967 = vadd.f32 0.0, %v966
    %v968 = vpop.f32.mrb[0].mxu0
    %v969 = vpop.f32.mrb[0].mxu0
    %970 = vdwg.mxu0
    %971 = vmatprep.subr.bf16.mxu0 %v659
    %972 = vmatpush1.bf16.msra.mxu0 %v658
    %973 = vmatprep.subr.bf16.mxu0 %v663
    %974 = vmatpush1.bf16.msra.mxu0 %v662
    %975 = vmatprep.subr.bf16.mxu0 %v667
    %976 = vmatpush1.bf16.msra.mxu0 %v666
    %977 = vmatprep.subr.bf16.mxu0 %v671
    %978 = vmatpush1.bf16.msra.mxu0 %v670
    %979 = vmatprep.subr.bf16.mxu0 %v675
    %980 = vmatpush1.bf16.msra.mxu0 %v674
    %981 = vmatprep.subr.bf16.mxu0 %v679
    %982 = vmatpush1.bf16.msra.mxu0 %v678
    %983 = vmatprep.subr.bf16.mxu0 %v683
    %984 = vmatpush1.bf16.msra.mxu0 %v682
    %985 = vmatprep.subr.bf16.mxu0 %v687
    %986 = vmatpush1.bf16.msra.mxu0 %v686
    %987 = vmatprep.subr.bf16.mxu0 %v691
    %988 = vmatpush1.bf16.msra.mxu0 %v690
    %989 = vmatprep.subr.bf16.mxu0 %v695
    %990 = vmatpush1.bf16.msra.mxu0 %v694
    %991 = vmatprep.subr.bf16.mxu0 %v699
    %992 = vmatpush1.bf16.msra.mxu0 %v698
    %993 = vmatprep.subr.bf16.mxu0 %v703
    %994 = vmatpush1.bf16.msra.mxu0 %v702
    %995 = vmatprep.subr.bf16.mxu0 %v707
    %996 = vmatpush1.bf16.msra.mxu0 %v706
    %997 = vmatprep.subr.bf16.mxu0 %v711
    %998 = vmatpush1.bf16.msra.mxu0 %v710
    %999 = vmatprep.subr.bf16.mxu0 %v715
    %1000 = vmatpush1.bf16.msra.mxu0 %v714
    %1001 = vmatprep.subr.bf16.mxu0 %v719
    %1002 = vmatpush1.bf16.msra.mxu0 %v718
    %1003 = vmatprep.mubr.bf16.mxu0 %v79
    %1004 = vmatmul.mubr.bf16.gmra.mrb[0].mxu0 %v78
    %v1005 = vpop.f32.mrb[0].mxu0
    %v1006 = vadd.f32 %v965, %v1005
    %v1007 = vpop.f32.mrb[0].mxu0
    %v1008 = vadd.f32 %v967, %v1007
    %v1009 = vpop.f32.mrb[0].mxu0
    %v1010 = vpop.f32.mrb[0].mxu0
    %1011 = vdwg.mxu0
    %v1012 = vmul.f32 %v924, %v75
    %v1013 = vmul.f32 %v926, %v75
    %v1014 = vmul.f32 %v1006, %v75
    %v1015 = vmul.f32 %v1008, %v75
    %v1016 = vld [vmem:[%s2] sm:$0xf]
    %v1018 = vlaneseq
    %v1019 = vshrl.u32 %v1018, 7
    %v1020 = vsub.s32 0, %v1019
    %v1021 = vrot.slane %v1016, %v1020
    %v1022 = vlaneseq
    %v1023 = vshrl.u32 %v1022, 7
    %v1024 = vsub.s32 1, %v1023
    %v1025 = vrot.slane %v1016, %v1024
    %v1026 = vlaneseq
    %v1027 = vshrl.u32 %v1026, 7
    %v1028 = vsub.s32 2, %v1027
    %v1029 = vrot.slane %v1016, %v1028
    %v1030 = vlaneseq
    %v1031 = vshrl.u32 %v1030, 7
    %v1032 = vsub.s32 3, %v1031
    %v1033 = vrot.slane %v1016, %v1032
    %v1038 = vadd.f32 %v1012, %v1021
    %v1039 = vadd.f32 %v1013, %v1025
    %v1040 = vadd.f32 %v1014, %v1029
    %v1041 = vadd.f32 %v1015, %v1033
    %v1042 = vmax.f32 %v1038, 0.0
    %v1043 = vmax.f32 %v1039, 0.0
    %v1044 = vmax.f32 %v1040, 0.0
    %v1045 = vmax.f32 %v1041, 0.0
    %v1046 = vpack.c.bf16 %v1042, %v1042
    %v1047 = vpack.c.bf16 %v1043, %v1043
    %v1048 = vpack.c.bf16 %v1044, %v1044
    %v1049 = vpack.c.bf16 %v1045, %v1045
    %v1050 = vld [vmem:[#allocation7] sm:$0xf]
    %v1051 = vld [vmem:[#allocation7 + $0x4] sm:$0xf]
    %v1052 = vld [vmem:[#allocation7 + $0x8] sm:$0xf]
    %v1053 = vld [vmem:[#allocation7 + $0xc] sm:$0xf]
    %v1054 = vld [vmem:[#allocation7 + $0x10] sm:$0xf]
    %v1055 = vld [vmem:[#allocation7 + $0x14] sm:$0xf]
    %v1056 = vld [vmem:[#allocation7 + $0x18] sm:$0xf]
    %v1057 = vld [vmem:[#allocation7 + $0x1c] sm:$0xf]
    %v1058 = vld [vmem:[#allocation7 + $0x20] sm:$0xf]
    %v1059 = vld [vmem:[#allocation7 + $0x24] sm:$0xf]
    %v1060 = vld [vmem:[#allocation7 + $0x28] sm:$0xf]
    %v1061 = vld [vmem:[#allocation7 + $0x2c] sm:$0xf]
    %v1062 = vld [vmem:[#allocation7 + $0x30] sm:$0xf]
    %v1063 = vld [vmem:[#allocation7 + $0x34] sm:$0xf]
    %v1064 = vld [vmem:[#allocation7 + $0x38] sm:$0xf]
    %v1065 = vld [vmem:[#allocation7 + $0x3c] sm:$0xf]
    %v1066 = vld [vmem:[#allocation7 + $0x40] sm:$0xf]
    %v1067 = vld [vmem:[#allocation7 + $0x44] sm:$0xf]
    %v1068 = vld [vmem:[#allocation7 + $0x48] sm:$0xf]
    %v1069 = vld [vmem:[#allocation7 + $0x4c] sm:$0xf]
    %v1070 = vld [vmem:[#allocation7 + $0x50] sm:$0xf]
    %v1071 = vld [vmem:[#allocation7 + $0x54] sm:$0xf]
    %v1072 = vld [vmem:[#allocation7 + $0x58] sm:$0xf]
    %v1073 = vld [vmem:[#allocation7 + $0x5c] sm:$0xf]
    %v1074 = vld [vmem:[#allocation7 + $0x60] sm:$0xf]
    %v1075 = vld [vmem:[#allocation7 + $0x64] sm:$0xf]
    %v1076 = vld [vmem:[#allocation7 + $0x68] sm:$0xf]
    %v1077 = vld [vmem:[#allocation7 + $0x6c] sm:$0xf]
    %v1078 = vld [vmem:[#allocation7 + $0x70] sm:$0xf]
    %v1079 = vld [vmem:[#allocation7 + $0x74] sm:$0xf]
    %v1080 = vld [vmem:[#allocation7 + $0x78] sm:$0xf]
    %v1081 = vld [vmem:[#allocation7 + $0x7c] sm:$0xf]
    %v1082 = vld [vmem:[#allocation7 + $0x80] sm:$0xf]
    %v1083 = vld [vmem:[#allocation7 + $0x84] sm:$0xf]
    %v1084 = vld [vmem:[#allocation7 + $0x88] sm:$0xf]
    %v1085 = vld [vmem:[#allocation7 + $0x8c] sm:$0xf]
    %v1086 = vld [vmem:[#allocation7 + $0x90] sm:$0xf]
    %v1087 = vld [vmem:[#allocation7 + $0x94] sm:$0xf]
    %v1088 = vld [vmem:[#allocation7 + $0x98] sm:$0xf]
    %v1089 = vld [vmem:[#allocation7 + $0x9c] sm:$0xf]
    %v1090 = vld [vmem:[#allocation7 + $0xa0] sm:$0xf]
    %v1091 = vld [vmem:[#allocation7 + $0xa4] sm:$0xf]
    %v1092 = vld [vmem:[#allocation7 + $0xa8] sm:$0xf]
    %v1093 = vld [vmem:[#allocation7 + $0xac] sm:$0xf]
    %v1094 = vld [vmem:[#allocation7 + $0xb0] sm:$0xf]
    %v1095 = vld [vmem:[#allocation7 + $0xb4] sm:$0xf]
    %v1096 = vld [vmem:[#allocation7 + $0xb8] sm:$0xf]
    %v1097 = vld [vmem:[#allocation7 + $0xbc] sm:$0xf]
    %v1098 = vld [vmem:[#allocation7 + $0xc0] sm:$0xf]
    %v1099 = vld [vmem:[#allocation7 + $0xc4] sm:$0xf]
    %v1100 = vld [vmem:[#allocation7 + $0xc8] sm:$0xf]
    %v1101 = vld [vmem:[#allocation7 + $0xcc] sm:$0xf]
    %v1102 = vld [vmem:[#allocation7 + $0xd0] sm:$0xf]
    %v1103 = vld [vmem:[#allocation7 + $0xd4] sm:$0xf]
    %v1104 = vld [vmem:[#allocation7 + $0xd8] sm:$0xf]
    %v1105 = vld [vmem:[#allocation7 + $0xdc] sm:$0xf]
    %v1106 = vld [vmem:[#allocation7 + $0xe0] sm:$0xf]
    %v1107 = vld [vmem:[#allocation7 + $0xe4] sm:$0xf]
    %v1108 = vld [vmem:[#allocation7 + $0xe8] sm:$0xf]
    %v1109 = vld [vmem:[#allocation7 + $0xec] sm:$0xf]
    %v1110 = vld [vmem:[#allocation7 + $0xf0] sm:$0xf]
    %v1111 = vld [vmem:[#allocation7 + $0xf4] sm:$0xf]
    %v1112 = vld [vmem:[#allocation7 + $0xf8] sm:$0xf]
    %v1113 = vld [vmem:[#allocation7 + $0xfc] sm:$0xf]
    %v1114 = vld [vmem:[%s4] sm:$0x1]
    %v1116 = vlaneseq
    %v1117 = vshrl.u32 %v1116, 7
    %v1118 = vsub.s32 0, %v1117
    %v1119 = vrot.slane %v1114, %v1118
    %v1185 = vunpack.c.l.b16 %v1050
    %v1186 = vunpack.c.l.b16 %v1051
    %v1187 = vunpack.c.l.b16 %v1052
    %v1188 = vunpack.c.l.b16 %v1053
    %v1189 = vunpack.c.l.b16 %v1054
    %v1190 = vunpack.c.l.b16 %v1055
    %v1191 = vunpack.c.l.b16 %v1056
    %v1192 = vunpack.c.l.b16 %v1057
    %v1193 = vunpack.c.l.b16 %v1058
    %v1194 = vunpack.c.l.b16 %v1059
    %v1195 = vunpack.c.l.b16 %v1060
    %v1196 = vunpack.c.l.b16 %v1061
    %v1197 = vunpack.c.l.b16 %v1062
    %v1198 = vunpack.c.l.b16 %v1063
    %v1199 = vunpack.c.l.b16 %v1064
    %v1200 = vunpack.c.l.b16 %v1065
    %v1201 = vunpack.c.l.b16 %v1066
    %v1202 = vunpack.c.l.b16 %v1067
    %v1203 = vunpack.c.l.b16 %v1068
    %v1204 = vunpack.c.l.b16 %v1069
    %v1205 = vunpack.c.l.b16 %v1070
    %v1206 = vunpack.c.l.b16 %v1071
    %v1207 = vunpack.c.l.b16 %v1072
    %v1208 = vunpack.c.l.b16 %v1073
    %v1209 = vunpack.c.l.b16 %v1074
    %v1210 = vunpack.c.l.b16 %v1075
    %v1211 = vunpack.c.l.b16 %v1076
    %v1212 = vunpack.c.l.b16 %v1077
    %v1213 = vunpack.c.l.b16 %v1078
    %v1214 = vunpack.c.l.b16 %v1079
    %v1215 = vunpack.c.l.b16 %v1080
    %v1216 = vunpack.c.l.b16 %v1081
    %v1217 = vunpack.c.l.b16 %v1082
    %v1218 = vunpack.c.l.b16 %v1083
    %v1219 = vunpack.c.l.b16 %v1084
    %v1220 = vunpack.c.l.b16 %v1085
    %v1221 = vunpack.c.l.b16 %v1086
    %v1222 = vunpack.c.l.b16 %v1087
    %v1223 = vunpack.c.l.b16 %v1088
    %v1224 = vunpack.c.l.b16 %v1089
    %v1225 = vunpack.c.l.b16 %v1090
    %v1226 = vunpack.c.l.b16 %v1091
    %v1227 = vunpack.c.l.b16 %v1092
    %v1228 = vunpack.c.l.b16 %v1093
    %v1229 = vunpack.c.l.b16 %v1094
    %v1230 = vunpack.c.l.b16 %v1095
    %v1231 = vunpack.c.l.b16 %v1096
    %v1232 = vunpack.c.l.b16 %v1097
    %v1233 = vunpack.c.l.b16 %v1098
    %v1234 = vunpack.c.l.b16 %v1099
    %v1235 = vunpack.c.l.b16 %v1100
    %v1236 = vunpack.c.l.b16 %v1101
    %v1237 = vunpack.c.l.b16 %v1102
    %v1238 = vunpack.c.l.b16 %v1103
    %v1239 = vunpack.c.l.b16 %v1104
    %v1240 = vunpack.c.l.b16 %v1105
    %v1241 = vunpack.c.l.b16 %v1106
    %v1242 = vunpack.c.l.b16 %v1107
    %v1243 = vunpack.c.l.b16 %v1108
    %v1244 = vunpack.c.l.b16 %v1109
    %v1245 = vunpack.c.l.b16 %v1110
    %v1246 = vunpack.c.l.b16 %v1111
    %v1247 = vunpack.c.l.b16 %v1112
    %v1248 = vunpack.c.l.b16 %v1113
    %v1249 = vpack.c.b16 %v1186, %v1185
    %v1250 = vpack.c.b16 %v1188, %v1187
    %v1251 = vpack.c.b16 %v1190, %v1189
    %v1252 = vpack.c.b16 %v1192, %v1191
    %v1253 = vpack.c.b16 %v1194, %v1193
    %v1254 = vpack.c.b16 %v1196, %v1195
    %v1255 = vpack.c.b16 %v1198, %v1197
    %v1256 = vpack.c.b16 %v1200, %v1199
    %v1257 = vpack.c.b16 %v1202, %v1201
    %v1258 = vpack.c.b16 %v1204, %v1203
    %v1259 = vpack.c.b16 %v1206, %v1205
    %v1260 = vpack.c.b16 %v1208, %v1207
    %v1261 = vpack.c.b16 %v1210, %v1209
    %v1262 = vpack.c.b16 %v1212, %v1211
    %v1263 = vpack.c.b16 %v1214, %v1213
    %v1264 = vpack.c.b16 %v1216, %v1215
    %v1265 = vpack.c.b16 %v1218, %v1217
    %v1266 = vpack.c.b16 %v1220, %v1219
    %v1267 = vpack.c.b16 %v1222, %v1221
    %v1268 = vpack.c.b16 %v1224, %v1223
    %v1269 = vpack.c.b16 %v1226, %v1225
    %v1270 = vpack.c.b16 %v1228, %v1227
    %v1271 = vpack.c.b16 %v1230, %v1229
    %v1272 = vpack.c.b16 %v1232, %v1231
    %v1273 = vpack.c.b16 %v1234, %v1233
    %v1274 = vpack.c.b16 %v1236, %v1235
    %v1275 = vpack.c.b16 %v1238, %v1237
    %v1276 = vpack.c.b16 %v1240, %v1239
    %v1277 = vpack.c.b16 %v1242, %v1241
    %v1278 = vpack.c.b16 %v1244, %v1243
    %v1279 = vpack.c.b16 %v1246, %v1245
    %v1280 = vpack.c.b16 %v1248, %v1247
    %1313 = vmatprep.subr.bf16.mxu0 0
    %1314 = vmatpush1.bf16.msra.mxu0 %v1249
    %1315 = vmatprep.subr.bf16.mxu0 0
    %1316 = vmatpush1.bf16.msra.mxu0 %v1250
    %1317 = vmatprep.subr.bf16.mxu0 0
    %1318 = vmatpush1.bf16.msra.mxu0 %v1251
    %1319 = vmatprep.subr.bf16.mxu0 0
    %1320 = vmatpush1.bf16.msra.mxu0 %v1252
    %1321 = vmatprep.subr.bf16.mxu0 0
    %1322 = vmatpush1.bf16.msra.mxu0 %v1253
    %1323 = vmatprep.subr.bf16.mxu0 0
    %1324 = vmatpush1.bf16.msra.mxu0 %v1254
    %1325 = vmatprep.subr.bf16.mxu0 0
    %1326 = vmatpush1.bf16.msra.mxu0 %v1255
    %1327 = vmatprep.subr.bf16.mxu0 0
    %1328 = vmatpush1.bf16.msra.mxu0 %v1256
    %1329 = vmatprep.subr.bf16.mxu0 0
    %1330 = vmatpush1.bf16.msra.mxu0 %v1257
    %1331 = vmatprep.subr.bf16.mxu0 0
    %1332 = vmatpush1.bf16.msra.mxu0 %v1258
    %1333 = vmatprep.subr.bf16.mxu0 0
    %1334 = vmatpush1.bf16.msra.mxu0 %v1259
    %1335 = vmatprep.subr.bf16.mxu0 0
    %1336 = vmatpush1.bf16.msra.mxu0 %v1260
    %1337 = vmatprep.subr.bf16.mxu0 0
    %1338 = vmatpush1.bf16.msra.mxu0 %v1261
    %1339 = vmatprep.subr.bf16.mxu0 0
    %1340 = vmatpush1.bf16.msra.mxu0 %v1262
    %1341 = vmatprep.subr.bf16.mxu0 0
    %1342 = vmatpush1.bf16.msra.mxu0 %v1263
    %1343 = vmatprep.subr.bf16.mxu0 0
    %1344 = vmatpush1.bf16.msra.mxu0 %v1264
    %1345 = vmatprep.mubr.bf16.mxu0 %v1047
    %1346 = vmatmul.mubr.bf16.gmra.mrb[0].mxu0 %v1046
    %v1347 = vpop.f32.mrb[0].mxu0
    %v1348 = vadd.f32 %v1119, %v1347
    %v1349 = vpop.f32.mrb[0].mxu0
    %v1350 = vpop.f32.mrb[0].mxu0
    %v1351 = vpop.f32.mrb[0].mxu0
    %1352 = vdwg.mxu0
    %1353 = vmatprep.subr.bf16.mxu0 0
    %1354 = vmatpush1.bf16.msra.mxu0 %v1265
    %1355 = vmatprep.subr.bf16.mxu0 0
    %1356 = vmatpush1.bf16.msra.mxu0 %v1266
    %1357 = vmatprep.subr.bf16.mxu0 0
    %1358 = vmatpush1.bf16.msra.mxu0 %v1267
    %1359 = vmatprep.subr.bf16.mxu0 0
    %1360 = vmatpush1.bf16.msra.mxu0 %v1268
    %1361 = vmatprep.subr.bf16.mxu0 0
    %1362 = vmatpush1.bf16.msra.mxu0 %v1269
    %1363 = vmatprep.subr.bf16.mxu0 0
    %1364 = vmatpush1.bf16.msra.mxu0 %v1270
    %1365 = vmatprep.subr.bf16.mxu0 0
    %1366 = vmatpush1.bf16.msra.mxu0 %v1271
    %1367 = vmatprep.subr.bf16.mxu0 0
    %1368 = vmatpush1.bf16.msra.mxu0 %v1272
    %1369 = vmatprep.subr.bf16.mxu0 0
    %1370 = vmatpush1.bf16.msra.mxu0 %v1273
    %1371 = vmatprep.subr.bf16.mxu0 0
    %1372 = vmatpush1.bf16.msra.mxu0 %v1274
    %1373 = vmatprep.subr.bf16.mxu0 0
    %1374 = vmatpush1.bf16.msra.mxu0 %v1275
    %1375 = vmatprep.subr.bf16.mxu0 0
    %1376 = vmatpush1.bf16.msra.mxu0 %v1276
    %1377 = vmatprep.subr.bf16.mxu0 0
    %1378 = vmatpush1.bf16.msra.mxu0 %v1277
    %1379 = vmatprep.subr.bf16.mxu0 0
    %1380 = vmatpush1.bf16.msra.mxu0 %v1278
    %1381 = vmatprep.subr.bf16.mxu0 0
    %1382 = vmatpush1.bf16.msra.mxu0 %v1279
    %1383 = vmatprep.subr.bf16.mxu0 0
    %1384 = vmatpush1.bf16.msra.mxu0 %v1280
    %1385 = vmatprep.mubr.bf16.mxu0 %v1049
    %1386 = vmatmul.mubr.bf16.gmra.mrb[0].mxu0 %v1048
    %v1387 = vpop.f32.mrb[0].mxu0
    %v1388 = vadd.f32 %v1348, %v1387
    %v1389 = vpop.f32.mrb[0].mxu0
    %v1390 = vpop.f32.mrb[0].mxu0
    %v1391 = vpop.f32.mrb[0].mxu0
    %1392 = vdwg.mxu0
    %v1393 = vtanh.pop %v1388
    %1394 = vst [vmem:[#allocation8] sm:$0xff] %v1393
    // Predicated region
    $region34: #{tpu_custom_call.1} parent=1 // pred_check
      _
    $region35: #{tpu_custom_call.1} parent=1 // pred_check_branch
      %1396 = sbr.rel (0) target = $region37
    $region36: #{tpu_custom_call.1} parent=1 // pred_region
      %s1398 = ssub.s32 128, 128
      %1399 = vsyncadd [#allocation4], %s1398
      %s1401 = sshll.u32 [#allocation8], 4
      %s1402 = int_to_ptr.vmem [resolvable:$true] %s1401
      %1404 = dma.vmem_to_hbm [thread:$0]  %s1402, 128, %s5, [#allocation4]
    $region37: #{tpu_custom_call.1} parent=1 // pred_fallthru
      _
    // Predicated region
    $region38: #{tpu_custom_call.1} parent=1 // pred_check
      _
    $region39: #{tpu_custom_call.1} parent=1 // pred_check_branch
      %1406 = sbr.rel (0) target = $region41
    $region40: #{tpu_custom_call.1} parent=1 // pred_region
      %1407 = dma.done [#allocation4], 128
    $region41: #{tpu_custom_call.1} parent=1 // pred_fallthru
      _
    %1408 = vsyncpa [#allocation3], 1
    %1409 = vsyncpa [#allocation6], 1
    %1410 = vsyncpa [#allocation4], 1

</llo_original>
